<compile_context>
chip_gen: v5e
topology: v5e:2x2
jax: 0.10.0
libtpu: 0.0.40
codegen_flags: <defaults>
</compile_context>

<pallas_src>
import functools

import jax
import jax.numpy as jnp
from jax.experimental import pallas as pl
from jax.experimental.pallas import tpu as pltpu


def _round_up(x, m):
    return (x + m - 1) // m * m


def _softmax_last(e):
    """Max-shifted softmax over the last axis (f32 math)."""
    m = jnp.max(e, axis=-1, keepdims=True)
    p = jnp.exp(e - m)
    denom = jnp.sum(p, axis=-1, keepdims=True)
    r = pl.reciprocal(denom, approx=True)
    r = r * (2.0 - denom * r)          # one Newton step -> ~f32 accurate
    return p * r


# ----------------------------- kernels ------------------------------------ #
def _attn_dot_kernel(q_ref, h_ref, o_ref):
    e = jnp.einsum("bsh,blh->bsl", q_ref[...], h_ref[...],
                   preferred_element_type=jnp.float32)
    o_ref[...] = _softmax_last(e).astype(o_ref.dtype)


def _attn_general_kernel(q_ref, h_ref, w_ref, o_ref):
    # score(q, h) = q . (W h + b).  q.b is constant along the softmax (L) axis
    # -> bias dropped; contraction reordered to qW = q @ W then e = qW . h
    # (S*H^2 instead of L*H^2 MXU work).
    q = q_ref[...]
    bb, s, hh = q.shape
    # Note: a direct 3D x 2D dot_general is not reliably lowered by Mosaic, so
    # collapse (b, s) for the weight contraction.  When S % 8 == 0 the collapse
    # is layout-preserving (no extra VMEM copy).
    qw = jnp.dot(q.reshape(bb * s, hh), w_ref[...],
                 preferred_element_type=jnp.float32)
    qw = qw.reshape(bb, s, hh).astype(q.dtype)
    e = jnp.einsum("bsi,bli->bsl", qw, h_ref[...],
                   preferred_element_type=jnp.float32)
    o_ref[...] = _softmax_last(e).astype(o_ref.dtype)


def _attn_concat_kernel(h_ref, v2_ref, o_ref):
    # score(q, h) = other . (W1 q + W2 h + b).  The W1 q and bias terms are
    # constant along the softmax (L) axis and cancel under softmax; only
    # c[l] = (other @ W2) . h[l] survives, so the weights are independent of
    # the state row: emit one row per batch, wrapper broadcasts over S.
    h = h_ref[...].astype(jnp.float32)                    # [bb, L, H]
    v2 = v2_ref[...].astype(jnp.float32)                  # [1, H]
    c = jnp.sum(h * v2[None, :, :], axis=-1)              # [bb, L]
    o_ref[...] = _softmax_last(c)[:, None, :].astype(o_ref.dtype)


# ------------------------- VMEM footprint model ---------------------------- #
def _block_vmem_bytes(method, bb, S, L, H, in_bytes, out_bytes, w_bytes):
    """Conservative per-grid-step VMEM footprint: double-buffered in/out blocks
    plus the f32 softmax intermediates, using Mosaic's padded tile layout."""
    sub_in = max(8, 32 // max(in_bytes, 1))
    sub_out = max(8, 32 // max(out_bytes, 1))
    Hp = _round_up(H, 128)
    Lp = _round_up(L, 128)
    rows = S if method != "concat" else 1
    q = bb * _round_up(S, sub_in) * Hp * in_bytes if method != "concat" else 0
    h = bb * _round_up(L, sub_in) * Hp * in_bytes
    o = bb * _round_up(rows, sub_out) * Lp * out_bytes
    w = 0
    if method == "general":
        w = _round_up(H, max(8, 32 // max(w_bytes, 1))) * Hp * w_bytes
    elif method == "concat":
        w = max(8, 32 // max(w_bytes, 1)) * Hp * w_bytes
    inter = 2 * bb * _round_up(rows, 8) * Lp * 4          # e and p (f32)
    return 2 * (q + h + o + w) + inter


# ----------------------------- wrapper ------------------------------------ #
@functools.partial(jax.jit, static_argnames=("method",))
def attn_forward(out_state, history, params, *, method):
    B, S, H = out_state.shape
    _, L, _ = history.shape

    q, h = out_state, history          # keep source dtype; f32 accum in-kernel
    out_dtype = jnp.result_type(q.dtype, h.dtype)
    in_bytes = max(jnp.dtype(q.dtype).itemsize, jnp.dtype(h.dtype).itemsize)
    out_bytes = jnp.dtype(out_dtype).itemsize

    if method == "dot":
        kernel, w_bytes = _attn_dot_kernel, 0
    elif method == "general":
        W = params["W"]                # nn.Linear weight, [H_out, H_in]
        w_bytes = jnp.dtype(W.dtype).itemsize
        kernel = _attn_general_kernel
    elif method == "concat":
        # v2 = other @ W2, the half of the concat weight that hits history.
        v2 = jnp.dot(params["other"], params["W"][:, H:]).reshape(1, H)
        v2 = v2.astype(h.dtype)
        w_bytes = jnp.dtype(v2.dtype).itemsize
        kernel = _attn_concat_kernel
    else:
        raise ValueError(method)

    # --- batch blocking from a real VMEM budget --------------------------- #
    try:
        vmem_cap = int(pltpu.get_tpu_info().vmem_capacity_bytes)
    except Exception:
        vmem_cap = 64 * 1024 * 1024    # v7x per-TC physical; be conservative
    budget = min(vmem_cap // 3, 24 * 1024 * 1024)

    def foot(nbb):
        return _block_vmem_bytes(method, nbb, S, L, H, in_bytes, out_bytes,
                                 w_bytes)

    bb = min(B, 1024)
    while bb > 1 and foot(bb) > budget:
        bb //= 2
    if B >= 2:                         # >= 2 grid steps so both v7x TCs work
        bb = min(bb, (B + 1) // 2)
    # TODO(synk): add an L-tiling axis (online softmax) for the case where even
    # bb == 1 does not fit the scoped-VMEM budget (very large L * H).
    vmem_limit = int(min(max(foot(bb) * 5 // 4, 16 * 1024 * 1024),
                         vmem_cap * 45 // 100))
    grid = (pl.cdiv(B, bb),)

    h_spec = pl.BlockSpec((bb, L, H), lambda b: (b, 0, 0))
    param_spec = lambda shape: pl.BlockSpec(shape, lambda b: (0, 0))

    if method == "concat":
        in_specs = [h_spec, param_spec((1, H))]
        args = (h, v2)
        out_shape = jax.ShapeDtypeStruct((B, 1, L), out_dtype)
        out_specs = pl.BlockSpec((bb, 1, L), lambda b: (b, 0, 0))
    else:
        q_spec = pl.BlockSpec((bb, S, H), lambda b: (b, 0, 0))
        if method == "general":
            in_specs = [q_spec, h_spec, param_spec((H, H))]
            args = (q, h, W)
        else:
            in_specs = [q_spec, h_spec]
            args = (q, h)
        out_shape = jax.ShapeDtypeStruct((B, S, L), out_dtype)
        out_specs = pl.BlockSpec((bb, S, L), lambda b: (b, 0, 0))

    out = pl.pallas_call(
        kernel,
        out_shape=out_shape,
        grid=grid,
        in_specs=in_specs,
        out_specs=out_specs,
        compiler_params=pltpu.CompilerParams(
            dimension_semantics=("parallel",),
            vmem_limit_bytes=vmem_limit),
    )(*args)

    if method == "concat":
        # Weights are identical for every state row; broadcast outside the
        # kernel (or let the consumer do it) instead of storing S copies.
        out = jnp.broadcast_to(out, (B, S, L))
    return out


# --------------------------- pure-JAX reference ---------------------------- #
def attn_ref(out_state, history, params, method):
    if method == "dot":
        e = jnp.einsum("bsh,blh->bsl", out_state, history)
    elif method == "general":
        he = jnp.einsum("blh,oh->blo", history, params["W"]) + params["b"]
        e = jnp.einsum("bsh,blh->bsl", out_state, he)
    elif method == "concat":
        H = out_state.shape[-1]
        W1, W2 = params["W"][:, :H], params["W"][:, H:]
        a = jnp.einsum("bsh,oh,o->bs", out_state, W1, params["other"])
        c = jnp.einsum("blh,oh,o->bl", history, W2, params["other"])
        e = a[:, :, None] + c[:, None, :] + jnp.dot(params["other"], params["b"])
    return jax.nn.softmax(e, axis=-1)


if __name__ == "__main__":
    B, S, L, H = 2, 8, 8, 32  # batch, state_len, seq_len, hidden_size

    key = jax.random.PRNGKey(0)
    k_q, k_h, k_w, k_b, k_w2, k_b2, k_o = jax.random.split(key, 7)

    out_state = jax.random.normal(k_q, (B, S, H), dtype=jnp.float32)
    history = jax.random.normal(k_h, (B, L, H), dtype=jnp.float32)

    params_general = {
        "W": jax.random.normal(k_w, (H, H), dtype=jnp.float32) * 0.1,
        "b": jax.random.normal(k_b, (H,), dtype=jnp.float32) * 0.1,
    }
    params_concat = {
        "W": jax.random.normal(k_w2, (H, 2 * H), dtype=jnp.float32) * 0.1,
        "b": jax.random.normal(k_b2, (H,), dtype=jnp.float32) * 0.1,
        "other": jax.random.normal(k_o, (H,), dtype=jnp.float32) * 0.1,
    }

    ok = True
    for method, params in (("dot", {}), ("general", params_general),
                           ("concat", params_concat)):
        out = attn_forward(out_state, history, params, method=method)
        jax.block_until_ready(out)
        ref = attn_ref(out_state, history, params, method)
        if not jnp.allclose(out, ref, atol=1e-5, rtol=1e-5):
            ok = False
            print(f"MISMATCH for method={method}: "
                  f"max_err={float(jnp.max(jnp.abs(out - ref)))}")
    if ok:
        print("KERNEL_OK")
</pallas_src>

<mosaic_0001>
module attributes {stable_mosaic.version = 11 : i64} {
  func.func @_attn_dot_kernel(%arg0: i32, %arg1: memref<1x8x32xf32, #tpu.memory_space<vmem>>, %arg2: memref<1x8x32xf32, #tpu.memory_space<vmem>>, %arg3: memref<1x8x8xf32, #tpu.memory_space<vmem>>) attributes {dimension_semantics = [#tpu.dimension_semantics<parallel>], iteration_bounds = array<i64: 2>, scalar_prefetch = 0 : i64, scratch_operands = 0 : i64, tpu.core_type = #tpu.core_type<tc>, window_params = [{transform_indices = @transform_0, window_bounds = array<i64: 1, 8, 32>}, {transform_indices = @transform_1, window_bounds = array<i64: 1, 8, 32>}, {transform_indices = @transform_2, window_bounds = array<i64: 1, 8, 8>}]} {
    %c0 = arith.constant 0 : index
    %c0_0 = arith.constant 0 : index
    %c0_1 = arith.constant 0 : index
    %0 = vector.load %arg1[%c0, %c0_0, %c0_1] : memref<1x8x32xf32, #tpu.memory_space<vmem>>, vector<1x8x32xf32>
    %c0_2 = arith.constant 0 : index
    %c0_3 = arith.constant 0 : index
    %c0_4 = arith.constant 0 : index
    %1 = vector.load %arg2[%c0_2, %c0_3, %c0_4] : memref<1x8x32xf32, #tpu.memory_space<vmem>>, vector<1x8x32xf32>
    "tpu.trace_start"() <{level = 10 : i32, message = "bsh,blh->bsl"}> : () -> ()
    %cst = arith.constant dense<0.000000e+00> : vector<1x8x8xf32>
    %2 = tpu.matmul %0, %1, %cst {dimension_numbers = #tpu.dot_dimension_numbers<[2], [2], [1], [1], [0, 0, 0, 1, 1, 1], [0], [0]>} : vector<1x8x32xf32>, vector<1x8x32xf32>, vector<1x8x8xf32> -> vector<1x8x8xf32>
    "tpu.trace_stop"() : () -> ()
    %cst_5 = arith.constant dense<0xFF800000> : vector<1x8xf32>
    %3 = vector.multi_reduction <maximumf>, %2, %cst_5 [2] : vector<1x8x8xf32> to vector<1x8xf32>
    %4 = vector.shape_cast %3 : vector<1x8xf32> to vector<1x8x1xf32>
    %5 = vector.broadcast %4 : vector<1x8x1xf32> to vector<1x8x8xf32>
    %6 = arith.subf %2, %5 : vector<1x8x8xf32>
    %7 = math.exp %6 : vector<1x8x8xf32>
    %cst_6 = arith.constant dense<0.000000e+00> : vector<1x8xf32>
    %8 = vector.multi_reduction <add>, %7, %cst_6 [2] : vector<1x8x8xf32> to vector<1x8xf32>
    %9 = vector.shape_cast %8 : vector<1x8xf32> to vector<1x8x1xf32>
    %10 = tpu.reciprocal %9 {approx = true} : vector<1x8x1xf32> -> vector<1x8x1xf32>
    %11 = arith.mulf %9, %10 : vector<1x8x1xf32>
    %cst_7 = arith.constant 2.000000e+00 : f32
    %12 = vector.broadcast %cst_7 : f32 to vector<1x8x1xf32>
    %13 = arith.subf %12, %11 : vector<1x8x1xf32>
    %14 = arith.mulf %10, %13 : vector<1x8x1xf32>
    %15 = vector.broadcast %14 : vector<1x8x1xf32> to vector<1x8x8xf32>
    %16 = arith.mulf %7, %15 : vector<1x8x8xf32>
    %c0_8 = arith.constant 0 : index
    %c0_9 = arith.constant 0 : index
    %c0_10 = arith.constant 0 : index
    %17 = vector.load %arg3[%c0_8, %c0_9, %c0_10] : memref<1x8x8xf32, #tpu.memory_space<vmem>>, vector<1x8x8xf32>
    tpu.vector_store %arg3[%c0_8, %c0_9, %c0_10], %16 {strides = array<i32>} : memref<1x8x8xf32, #tpu.memory_space<vmem>>, vector<1x8x8xf32>,
    return
  }
  func.func @transform_0(%arg0: i32) -> (i32, i32, i32) {
    %c0_i32 = arith.constant 0 : i32
    %c0_i32_0 = arith.constant 0 : i32
    %c0_i32_1 = arith.constant 0 : i32
    return %arg0, %c0_i32, %c0_i32_0 : i32, i32, i32
  }
  func.func @transform_1(%arg0: i32) -> (i32, i32, i32) {
    %c0_i32 = arith.constant 0 : i32
    %c0_i32_0 = arith.constant 0 : i32
    %c0_i32_1 = arith.constant 0 : i32
    return %arg0, %c0_i32, %c0_i32_0 : i32, i32, i32
  }
  func.func @transform_2(%arg0: i32) -> (i32, i32, i32) {
    %c0_i32 = arith.constant 0 : i32
    %c0_i32_0 = arith.constant 0 : i32
    %c0_i32_1 = arith.constant 0 : i32
    return %arg0, %c0_i32, %c0_i32_0 : i32, i32, i32
  }
}

</mosaic_0001>

<llo_original>
// kernel: attn_forward.1
$region0: #{attn_forward.1}
  #allocation0 [shape = 'u32[]', space=smem, size = 0x4, offset = 0x4, fixed_abs, tag = 'smem constant byte address 0x4 - core index']
  #allocation1 [shape = 'u32[72,128]{1,0:T(1,128)}', space=vmem, size = 0x9000, scoped, tag = 'internal scratch']
  %s0 = inlined_call_operand.hbm [shape: f32[2,8,32], index: 0, kind: input, shape index: {}]
  %s1 = inlined_call_operand.hbm [shape: f32[2,8,32], index: 1, kind: input, shape index: {}]
  %s2 = inlined_call_operand.hbm [shape: f32[2,8,8], index: 2, kind: output, shape index: {}]
  %s3 = sld [smem:[#allocation0]]
  $region49: #{attn_forward.1} parent=0
    _
  %s5 = ssub.s32 1, %s3
  %s6 = scalar_select 0, %s5, %s3
  $region1: #{attn_forward.1} parent=0
    #allocation2 [shape = 'u8[8192]{0}', space=vmem, size = 0x2000, scoped, tag = 'input window, operand 0']
    #allocation3 [shape = 's32[2]{0}', space=sflag, size = 0x8, scoped, tag = 'scoped memory for attn_forward.1']
    #allocation4 [shape = 's32[2]{0}', space=sflag, size = 0x8, scoped, tag = 'scoped memory for attn_forward.1']
    #allocation5 [shape = 'u8[8192]{0}', space=vmem, size = 0x2000, scoped, tag = 'input window, operand 1']
    #allocation6 [shape = 's32[2]{0}', space=sflag, size = 0x8, scoped, tag = 'scoped memory for attn_forward.1']
    #allocation7 [shape = 'u8[8192]{0}', space=vmem, size = 0x2000, scoped, tag = 'output window, operand 0']
    %7 = vsyncpa [#allocation3], 0
    %s8 = scalar_lea.sflag [#allocation3], 1
    %9 = vsyncpa %s8, 0
    %10 = vsyncpa [#allocation6], 0
    %s11 = scalar_lea.sflag [#allocation6], 1
    %12 = vsyncpa %s11, 0
    %13 = vsyncpa [#allocation4], 0
    %s14 = scalar_lea.sflag [#allocation4], 1
    %15 = vsyncpa %s14, 0
    loop: start=0, step=1, limit=4
    $region2: #{attn_forward.1} parent=1 // loop_pre_header
      _
    $region3: #{attn_forward.1} parent=1 // loop_header
      %s17 = sphi 0, %s21
      %p18 = scmp.ge.s32.totalorder %s17, 4
      %s27 = sphi 0, %s29
      %s30 = sphi 0, %s27
      %s31 = sphi 0, %s30
      %s47 = sphi 0, %s31
      %s53 = sphi 0, %s55
      %s56 = sphi 0, %s53
      %s57 = sphi 0, %s56
      %s73 = sphi 0, %s57
      %s79 = sphi 0, %s81
      %s82 = sphi 0, %s79
      %s83 = sphi 0, %s82
      %s99 = sphi 0, %s83
    $region4: #{attn_forward.1} parent=1 // loop_header_branch
      %20 = sbr.rel (%p18) target = $region8
    $region5: #{attn_forward.1} parent=1 // loop_body
      %s22 = ssub.s32 %s17, 1
      %s23 = ssub.s32 %s17, 2
      %s24 = sadd.s32 %s17, 1
      %s25 = ssub.s32 %s17, %s24
      %p26 = scmp.eq.s32.totalorder %s25, 0
      %s28 = sadd.s32 %s27, 1
      %s29 = scalar_select %p26, %s27, %s28
      %p32 = pneg %p26
      %p33 = scmp.eq.s32.totalorder %s17, 1
      %p34 = por %p32, %p33
      %p35 = scmp.ne.s32.totalorder %s27, %s30
      %p36 = scmp.eq.s32.totalorder %s17, 0
      %p37 = por %p35, %p36
      %p38 = scmp.ne.s32.totalorder %s27, %s30
      %p39 = scmp.eq.s32.totalorder %s22, 1
      %p40 = por %p38, %p39
      %p41 = scmp.ne.s32.totalorder %s30, %s31
      %p42 = scmp.eq.s32.totalorder %s22, 0
      %p43 = por %p41, %p42
      %p44 = scmp.ne.s32.totalorder %s30, %s31
      %p45 = scmp.eq.s32.totalorder %s23, 1
      %p46 = por %p44, %p45
      %p48 = scmp.ne.s32.totalorder %s31, %s47
      %p49 = scmp.eq.s32.totalorder %s23, 0
      %p50 = por %p48, %p49
      %s51 = ssub.s32 %s17, %s24
      %p52 = scmp.eq.s32.totalorder %s51, 0
      %s54 = sadd.s32 %s53, 1
      %s55 = scalar_select %p52, %s53, %s54
      %p58 = pneg %p52
      %p59 = scmp.eq.s32.totalorder %s17, 1
      %p60 = por %p58, %p59
      %p61 = scmp.ne.s32.totalorder %s53, %s56
      %p62 = scmp.eq.s32.totalorder %s17, 0
      %p63 = por %p61, %p62
      %p64 = scmp.ne.s32.totalorder %s53, %s56
      %p65 = scmp.eq.s32.totalorder %s22, 1
      %p66 = por %p64, %p65
      %p67 = scmp.ne.s32.totalorder %s56, %s57
      %p68 = scmp.eq.s32.totalorder %s22, 0
      %p69 = por %p67, %p68
      %p70 = scmp.ne.s32.totalorder %s56, %s57
      %p71 = scmp.eq.s32.totalorder %s23, 1
      %p72 = por %p70, %p71
      %p74 = scmp.ne.s32.totalorder %s57, %s73
      %p75 = scmp.eq.s32.totalorder %s23, 0
      %p76 = por %p74, %p75
      %s77 = ssub.s32 %s17, %s24
      %p78 = scmp.eq.s32.totalorder %s77, 0
      %s80 = sadd.s32 %s79, 1
      %s81 = scalar_select %p78, %s79, %s80
      %p84 = pneg %p78
      %p85 = scmp.eq.s32.totalorder %s17, 1
      %p86 = por %p84, %p85
      %p87 = scmp.ne.s32.totalorder %s79, %s82
      %p88 = scmp.eq.s32.totalorder %s17, 0
      %p89 = por %p87, %p88
      %p90 = scmp.ne.s32.totalorder %s79, %s82
      %p91 = scmp.eq.s32.totalorder %s22, 1
      %p92 = por %p90, %p91
      %p93 = scmp.ne.s32.totalorder %s82, %s83
      %p94 = scmp.eq.s32.totalorder %s22, 0
      %p95 = por %p93, %p94
      %p96 = scmp.ne.s32.totalorder %s82, %s83
      %p97 = scmp.eq.s32.totalorder %s23, 1
      %p98 = por %p96, %p97
      %p100 = scmp.ne.s32.totalorder %s83, %s99
      %p101 = scmp.eq.s32.totalorder %s23, 0
      %p102 = por %p100, %p101
      %p103 = scmp.le.s32.totalorder 1, %s17
      %p104 = scmp.lt.s32.totalorder %s17, 3
      %p105 = pnand %p103, %p104
      %p106 = pneg %p105
      // Predicated region
      $region9: #{attn_forward.1} parent=5 // pred_check
        _
      $region10: #{attn_forward.1} parent=5 // pred_check_branch
        %108 = sbr.rel (%p105) target = $region12
      $region11: #{attn_forward.1} parent=5 // pred_region
        %s109 = ssub.s32 %s17, 1
      $region12: #{attn_forward.1} parent=5 // pred_fallthru
        _
      %p110 = scmp.lt.s32.totalorder %s17, 2
      // Predicated region
      $region13: #{attn_forward.1} parent=5 // pred_check
        %p111 = pneg %p110
      $region14: #{attn_forward.1} parent=5 // pred_check_branch
        %113 = sbr.rel (%p111) target = $region16
      $region15: #{attn_forward.1} parent=5 // pred_region
        // Predicated region
        $region17: #{attn_forward.1} parent=15 // pred_check
          %p114 = pneg %p37
        $region18: #{attn_forward.1} parent=15 // pred_check_branch
          %116 = sbr.rel (%p114) target = $region20
        $region19: #{attn_forward.1} parent=15 // pred_region
          %s117 = sand.u32 %s27, 1
          %s118 = scalar_lea.sflag [#allocation3], %s117
          %s119 = sand.u32 %s27, 1
          %s120 = smul.addr %s119, 8
          %s121 = scalar_lea.vmem [#allocation2], %s120
          %123 = vsyncadd %s118, 0
          %s124 = smul.addr %s17, 8
          %s125 = scalar_lea.hbm %s0, %s124
          %s127 = sshll.u32 %s125, 4
          %s128 = int_to_ptr.hbm [resolvable:$true] %s127
          %s129 = sshll.u32 %s121, 4
          %s130 = int_to_ptr.vmem [resolvable:$true] %s129
          %132 = dma.hbm_to_vmem [thread:$0]  %s128, 128, %s130, %s118
        $region20: #{attn_forward.1} parent=15 // pred_fallthru
          _
        // Predicated region
        $region21: #{attn_forward.1} parent=15 // pred_check
          %p133 = pneg %p63
        $region22: #{attn_forward.1} parent=15 // pred_check_branch
          %135 = sbr.rel (%p133) target = $region24
        $region23: #{attn_forward.1} parent=15 // pred_region
          %s136 = sand.u32 %s53, 1
          %s137 = scalar_lea.sflag [#allocation6], %s136
          %s138 = sand.u32 %s53, 1
          %s139 = smul.addr %s138, 8
          %s140 = scalar_lea.vmem [#allocation5], %s139
          %142 = vsyncadd %s137, 0
          %s143 = smul.addr %s17, 8
          %s144 = scalar_lea.hbm %s1, %s143
          %s146 = sshll.u32 %s144, 4
          %s147 = int_to_ptr.hbm [resolvable:$true] %s146
          %s148 = sshll.u32 %s140, 4
          %s149 = int_to_ptr.vmem [resolvable:$true] %s148
          %151 = dma.hbm_to_vmem [thread:$0]  %s147, 128, %s149, %s137
        $region24: #{attn_forward.1} parent=15 // pred_fallthru
          _
      $region16: #{attn_forward.1} parent=5 // pred_fallthru
        _
      %p152 = scmp.le.s32.totalorder 1, %s17
      %p153 = scmp.lt.s32.totalorder %s17, 3
      %p154 = pnand %p152, %p153
      %p155 = pneg %p154
      // Predicated region
      $region25: #{attn_forward.1} parent=5 // pred_check
        _
      $region26: #{attn_forward.1} parent=5 // pred_check_branch
        %157 = sbr.rel (%p154) target = $region28
      $region27: #{attn_forward.1} parent=5 // pred_region
        %s158 = ssub.s32 %s17, 1
        %s159 = sand.u32 %s30, 1
        %s160 = scalar_lea.sflag [#allocation3], %s159
        %s161 = sand.u32 %s30, 1
        %s162 = smul.addr %s161, 8
        %s163 = scalar_lea.vmem [#allocation2], %s162
        // Predicated region
        $region29: #{attn_forward.1} parent=27 // pred_check
          %p164 = pneg %p43
        $region30: #{attn_forward.1} parent=27 // pred_check_branch
          %166 = sbr.rel (%p164) target = $region32
        $region31: #{attn_forward.1} parent=27 // pred_region
          %168 = dma.done %s160, 128
        $region32: #{attn_forward.1} parent=27 // pred_fallthru
          _
        %s169 = sand.u32 %s56, 1
        %s170 = scalar_lea.sflag [#allocation6], %s169
        %s171 = sand.u32 %s56, 1
        %s172 = smul.addr %s171, 8
        %s173 = scalar_lea.vmem [#allocation5], %s172
        // Predicated region
        $region33: #{attn_forward.1} parent=27 // pred_check
          %p174 = pneg %p69
        $region34: #{attn_forward.1} parent=27 // pred_check_branch
          %176 = sbr.rel (%p174) target = $region36
        $region35: #{attn_forward.1} parent=27 // pred_region
          %178 = dma.done %s170, 128
        $region36: #{attn_forward.1} parent=27 // pred_fallthru
          _
        %s179 = sand.u32 %s30, 1
        %s180 = scalar_lea.sflag [#allocation3], %s179
        %s181 = sand.u32 %s30, 1
        %s182 = smul.addr %s181, 8
        %s183 = scalar_lea.vmem [#allocation2], %s182
        %p184 = pneg %p43
        %p185 = pneg %p40
        %s186 = sand.u32 %s56, 1
        %s187 = scalar_lea.sflag [#allocation6], %s186
        %s188 = sand.u32 %s56, 1
        %s189 = smul.addr %s188, 8
        %s190 = scalar_lea.vmem [#allocation5], %s189
        %p191 = pneg %p69
        %p192 = pneg %p66
        %p193 = pneg %p95
        %p194 = pneg %p92
        %s195 = sand.u32 %s82, 1
        %s196 = scalar_lea.sflag [#allocation4], %s195
        %s197 = sand.u32 %s82, 1
        %s198 = smul.addr %s197, 8
        %s199 = scalar_lea.vmem [#allocation7], %s198
        %v200 = vld [vmem:[%s163] sm:$0xff]
        %v201 = vld [vmem:[%s173] sm:$0xff]
        %vm202 = vcmask 261120
        %v204 = vsel %vm202, %v200, 0
        %v207 = vsel %vm202, %v201, 0
        %209 = vmatpush.xpose.msra.mxu0 0.0
        %210 = vmatpush.xpose.msra.mxu0 0.0
        %211 = vmatpush.xpose.msra.mxu0 0.0
        %212 = vmatpush.xpose.msra.mxu0 0.0
        %213 = vmatpush.xpose.msra.mxu0 0.0
        %214 = vmatpush.xpose.msra.mxu0 0.0
        %215 = vmatpush.xpose.msra.mxu0 0.0
        %216 = vmatpush.xpose.msra.mxu0 0.0
        %217 = vmatpush.xpose.msra.mxu0 0.0
        %218 = vmatpush.xpose.msra.mxu0 0.0
        %219 = vmatpush.xpose.msra.mxu0 0.0
        %220 = vmatpush.xpose.msra.mxu0 0.0
        %221 = vmatpush.xpose.msra.mxu0 0.0
        %222 = vmatpush.xpose.msra.mxu0 0.0
        %223 = vmatpush.xpose.msra.mxu0 0.0
        %224 = vmatpush.xpose.msra.mxu0 %v207
        %225 = vmatmul.f32.gmra.mxu0 %v204
        %v226 = vpop.f32.mrf.mxu0
        %v227 = vadd.f32 0.0, %v226
        %228 = vdwg.mxu0
        %vm229 = vcmask 64512
        %v230 = vsel %vm229, %v227, -inf
        %231 = vmax.xlane.f32.xlu0 %v230
        %v232 = vpop.xlane.xlu0 %231
        %v233 = vsub.f32 %v227, %v232
        %v234 = vmul.f32 %v233, 1.442695
        %v235 = vpow.pop %v234
        %v236 = vsel %vm229, %v235, 0.0
        %237 = vadd.xlane.f32.xlu0 %v236
        %v238 = vpop.xlane.xlu0 %237
        %v239 = vrcp.pop %v238
        %v240 = vmul.f32 %v238, %v239
        %v241 = vsub.f32 2.0, %v240
        %v242 = vmul.f32 %v239, %v241
        %v243 = vmul.f32 %v235, %v242
        %244 = vst.msk [vmem:[%s199] sm:$0xff] %vm229, %v243
        %s245 = sand.u32 %s82, 1
        %s246 = scalar_lea.sflag [#allocation4], %s245
        %s247 = sand.u32 %s82, 1
        %s248 = smul.addr %s247, 8
        %s249 = scalar_lea.vmem [#allocation7], %s248
        // Predicated region
        $region37: #{attn_forward.1} parent=27 // pred_check
          %p250 = pneg %p92
        $region38: #{attn_forward.1} parent=27 // pred_check_branch
          %252 = sbr.rel (%p250) target = $region40
        $region39: #{attn_forward.1} parent=27 // pred_region
          %254 = vsyncadd %s246, 0
          %s255 = smul.addr %s22, 8
          %s256 = scalar_lea.hbm %s2, %s255
          %s258 = sshll.u32 %s249, 4
          %s259 = int_to_ptr.vmem [resolvable:$true] %s258
          %s260 = sshll.u32 %s256, 4
          %s261 = int_to_ptr.hbm [resolvable:$true] %s260
          %263 = dma.vmem_to_hbm [thread:$0]  %s259, 128, %s261, %s246
        $region40: #{attn_forward.1} parent=27 // pred_fallthru
          _
      $region28: #{attn_forward.1} parent=5 // pred_fallthru
        _
      %p264 = scmp.le.s32.totalorder 2, %s17
      // Predicated region
      $region41: #{attn_forward.1} parent=5 // pred_check
        %p265 = pneg %p264
      $region42: #{attn_forward.1} parent=5 // pred_check_branch
        %267 = sbr.rel (%p265) target = $region44
      $region43: #{attn_forward.1} parent=5 // pred_region
        %s268 = ssub.s32 %s17, 2
        // Predicated region
        $region45: #{attn_forward.1} parent=43 // pred_check
          %p269 = pneg %p98
        $region46: #{attn_forward.1} parent=43 // pred_check_branch
          %271 = sbr.rel (%p269) target = $region48
        $region47: #{attn_forward.1} parent=43 // pred_region
          %s272 = sand.u32 %s83, 1
          %s273 = scalar_lea.sflag [#allocation4], %s272
          %s274 = sand.u32 %s83, 1
          %s275 = smul.addr %s274, 8
          %s276 = scalar_lea.vmem [#allocation7], %s275
          %278 = dma.done %s273, 128
        $region48: #{attn_forward.1} parent=43 // pred_fallthru
          _
      $region44: #{attn_forward.1} parent=5 // pred_fallthru
        _
    $region6: #{attn_forward.1} parent=1 // loop_footer
      %s21 = sadd.s32 1, %s17
    $region7: #{attn_forward.1} parent=1 // loop_footer_branch
      %16 = sbr.rel target = $region3
    $region8: #{attn_forward.1} parent=1 // loop_exit
      _
    %279 = vsyncpa [#allocation3], 1
    %s280 = scalar_lea.sflag [#allocation3], 1
    %281 = vsyncpa %s280, 1
    %282 = vsyncpa [#allocation6], 1
    %s283 = scalar_lea.sflag [#allocation6], 1
    %284 = vsyncpa %s283, 1
    %285 = vsyncpa [#allocation4], 1
    %s286 = scalar_lea.sflag [#allocation4], 1
    %287 = vsyncpa %s286, 1

</llo_original>
